<compile_context>
chip_gen: v7x
topology: tpu7x:2x2x1
jax: 0.10.0
libtpu: 0.0.40
codegen_flags: <defaults>
</compile_context>

<pallas_src>
import functools

import jax
import jax.numpy as jnp
from jax.experimental import pallas as pl
from jax.experimental.pallas import tpu as pltpu


def _cdiv(a, b):
    return (a + b - 1) // b


def _tpu_budgets():
    """Generation-aware (VMEM scoped limit, x-block byte budget, target grid steps)."""
    vmem_physical = 64 << 20  # conservative default (v7x per-TensorCore)
    try:
        vmem_physical = int(pltpu.get_tpu_info().vmem_capacity_bytes)
    except Exception:  # pragma: no cover - best-effort hardware query
        pass
    num_tc = 1
    try:
        kind = jax.devices()[0].device_kind.lower()
        if "v7" in kind:
            num_tc = 2
    except Exception:  # pragma: no cover
        pass
    # Leave headroom for the compiler; cap at 96 MiB (v5e/v6e have 128 MiB).
    vmem_limit = min(int(vmem_physical * 3 // 4), 96 << 20)
    # x block is double-buffered and the f32 output blocks need room too.
    x_block_budget = min(8 << 20, vmem_limit // 6)
    target_steps = 8 if num_tc == 2 else 4
    return vmem_limit, x_block_budget, target_steps


def _pick_tile_hw(hw, n_batch, c_in, in_itemsize, x_block_budget, target_steps):
    """Spatial (lane-dim) tile size: as many bytes as the budget allows,
    multiple of 128 lanes, but keep >= target_steps grid steps so multi-TC
    chips (v7x) get work on both cores."""
    per_lane_bytes = c_in * in_itemsize
    tile = max(128, (x_block_budget // per_lane_bytes) // 128 * 128)
    if tile >= hw:
        return hw  # full-extent block is always legal
    while tile > 512 and n_batch * _cdiv(hw, tile) < target_steps:
        tile = max(512, (tile // 2) // 128 * 128)
    return tile


def _class_head_kernel(x_ref, w_ref, b_ref, o_ref):
    # x_ref: (B_blk, C_in, T)  bf16 activation tile, NCHW layout (spatial in lanes)
    # w_ref: (C_out, C_in)     bf16 1x1-conv weight (resident in VMEM across steps)
    # b_ref: (C_out, 1)        f32 bias column (broadcast across lanes)
    # o_ref: (B_blk, C_out, T) f32 lane-dense output tile
    w = w_ref[...]
    b = b_ref[...]
    for i in range(x_ref.shape[0]):  # B_blk == 1 except on tiny (hw<128) maps
        acc = jnp.dot(w, x_ref[i], preferred_element_type=jnp.float32)
        o_ref[i] = (acc + b).astype(o_ref.dtype)


@functools.partial(jax.jit, static_argnames=("num_anchors",))
def class_head_forward(x_nchw, weight, bias, *, num_anchors=3):
    """Forward pass of ClassHead.

    Args:
      x_nchw:  (N, C_in, H, W) float32 input (PyTorch NCHW convention).
      weight:  (C_out, C_in, 1, 1) conv weight (PyTorch layout), C_out = num_anchors*2.
      bias:    (C_out,) conv bias.
    Returns:
      (N, H*W*num_anchors, 2) float32 array, matching permute(0,2,3,1).view(N, -1, 2).
    """
    n, c_in, h, w = x_nchw.shape
    c_out = weight.shape[0]
    assert c_out == num_anchors * 2

    hw = h * w
    compute_dtype = jnp.bfloat16  # halves the dominant HBM read stream
    x_flat = x_nchw.reshape(n, c_in, hw).astype(compute_dtype)  # NCHW view + cast
    w_mat = weight.reshape(c_out, c_in).astype(compute_dtype)   # (C_out, C_in)
    b_col = bias.reshape(c_out, 1).astype(jnp.float32)          # f32 epilogue

    vmem_limit, x_block_budget, target_steps = _tpu_budgets()
    in_itemsize = jnp.dtype(compute_dtype).itemsize

    if hw < 128:
        # Deep FPN levels: lanes are already underfull; collapse batch into one
        # grid step instead of n overhead-dominated steps.
        tile_hw, batch_block = hw, n
    else:
        tile_hw = _pick_tile_hw(hw, n, c_in, in_itemsize, x_block_budget, target_steps)
        batch_block = 1

    grid = (n // batch_block, _cdiv(hw, tile_hw))

    cost = pl.CostEstimate(
        flops=2 * n * hw * c_in * c_out,
        transcendentals=0,
        bytes_accessed=(n * c_in * hw + c_out * c_in) * in_itemsize
        + n * c_out * hw * 4,
    )

    out_nc = pl.pallas_call(
        _class_head_kernel,
        out_shape=jax.ShapeDtypeStruct((n, c_out, hw), jnp.float32),
        grid_spec=pltpu.PrefetchScalarGridSpec(
            num_scalar_prefetch=0,
            grid=grid,
            in_specs=[
                pl.BlockSpec((batch_block, c_in, tile_hw), lambda b, j: (b, 0, j)),
                pl.BlockSpec((c_out, c_in), lambda b, j: (0, 0)),
                pl.BlockSpec((c_out, 1), lambda b, j: (0, 0)),
            ],
            out_specs=pl.BlockSpec(
                (batch_block, c_out, tile_hw), lambda b, j: (b, 0, j)
            ),
        ),
        compiler_params=pltpu.CompilerParams(
            dimension_semantics=("parallel", "parallel"),
            vmem_limit_bytes=vmem_limit,
        ),
        cost_estimate=cost,
    )(x_flat, w_mat, b_col)

    # (N, C_out, HW) -> (N, HW, C_out) -> (N, HW*num_anchors, 2).
    # Same element ordering as PyTorch's permute(0,2,3,1).contiguous().view(N,-1,2);
    # this transpose touches only the tiny C_out-wide output, not the input.
    # TODO(synk): fold this small transpose into the consumer (softmax over the
    # size-2 axis) to save one HBM pass over the (N, 6, HW) output.
    return jnp.transpose(out_nc, (0, 2, 1)).reshape(n, hw * num_anchors, 2)


if __name__ == "__main__":
    key = jax.random.PRNGKey(0)
    k_x, k_w, k_b = jax.random.split(key, 3)

    # Small shapes consistent with the module: batch=2, inchannels=64,
    # spatial=16x16, num_anchors=3 -> out channels = 6.
    N, C_IN, H, W = 2, 64, 16, 16
    NUM_ANCHORS = 3
    C_OUT = NUM_ANCHORS * 2

    x = jax.random.normal(k_x, (N, C_IN, H, W), dtype=jnp.float32)
    weight = jax.random.normal(k_w, (C_OUT, C_IN, 1, 1), dtype=jnp.float32) * 0.05
    bias = jax.random.normal(k_b, (C_OUT,), dtype=jnp.float32) * 0.05

    out = class_head_forward(x, weight, bias, num_anchors=NUM_ANCHORS)
    out = jax.block_until_ready(out)

    # Pure-JAX reference (1x1 conv == einsum over channels), with the same
    # bf16 input / f32 accumulate numerics as the kernel.
    x_bf = x.astype(jnp.bfloat16).astype(jnp.float32)
    w_bf = weight.reshape(C_OUT, C_IN).astype(jnp.bfloat16).astype(jnp.float32)
    ref = jnp.einsum("nchw,oc->nhwo", x_bf, w_bf) + bias
    ref = ref.reshape(N, H * W * NUM_ANCHORS, 2)

    assert out.shape == (N, H * W * NUM_ANCHORS, 2), out.shape
    assert jnp.allclose(out, ref, atol=5e-3, rtol=5e-3)
    print("KERNEL_OK")
</pallas_src>

<mosaic_0001>
module attributes {stable_mosaic.version = 11 : i64} {
  func.func @_class_head_kernel(%arg0: i32, %arg1: i32, %arg2: memref<1x64x256xbf16, #tpu.memory_space<vmem>>, %arg3: memref<6x64xbf16, #tpu.memory_space<vmem>>, %arg4: memref<6x1xf32, #tpu.memory_space<vmem>>, %arg5: memref<1x6x256xf32, #tpu.memory_space<vmem>>) attributes {dimension_semantics = [#tpu.dimension_semantics<parallel>, #tpu.dimension_semantics<parallel>], iteration_bounds = array<i64: 2, 1>, scalar_prefetch = 0 : i64, scratch_operands = 0 : i64, tpu.core_type = #tpu.core_type<tc>, window_params = [{transform_indices = @transform_0, window_bounds = array<i64: 1, 64, 256>}, {pipeline_mode = #tpu.pipeline_mode<synchronous>, transform_indices = @transform_1, window_bounds = array<i64: 6, 64>}, {pipeline_mode = #tpu.pipeline_mode<synchronous>, transform_indices = @transform_2, window_bounds = array<i64: 6, 1>}, {transform_indices = @transform_3, window_bounds = array<i64: 1, 6, 256>}]} {
    %c0 = arith.constant 0 : index
    %c0_0 = arith.constant 0 : index
    %0 = vector.load %arg3[%c0, %c0_0] : memref<6x64xbf16, #tpu.memory_space<vmem>>, vector<6x64xbf16>
    %c0_1 = arith.constant 0 : index
    %c0_2 = arith.constant 0 : index
    %1 = vector.load %arg4[%c0_1, %c0_2] : memref<6x1xf32, #tpu.memory_space<vmem>>, vector<6x1xf32>
    %c0_3 = arith.constant 0 : index
    %c0_4 = arith.constant 0 : index
    %c0_5 = arith.constant 0 : index
    %2 = vector.load %arg2[%c0_3, %c0_4, %c0_5] : memref<1x64x256xbf16, #tpu.memory_space<vmem>>, vector<1x64x256xbf16>
    %3 = vector.shape_cast %2 : vector<1x64x256xbf16> to vector<64x256xbf16>
    %cst = arith.constant dense<0.000000e+00> : vector<6x256xf32>
    %4 = tpu.matmul %0, %3, %cst {dimension_numbers = #tpu.dot_dimension_numbers<[1], [0], [0], [1], [0, 0, 1, 1], [], []>} : vector<6x64xbf16>, vector<64x256xbf16>, vector<6x256xf32> -> vector<6x256xf32>
    %5 = vector.broadcast %1 : vector<6x1xf32> to vector<6x256xf32>
    %6 = arith.addf %4, %5 : vector<6x256xf32>
    %c0_6 = arith.constant 0 : index
    %c0_7 = arith.constant 0 : index
    %c0_8 = arith.constant 0 : index
    %7 = vector.load %arg5[%c0_6, %c0_7, %c0_8] : memref<1x6x256xf32, #tpu.memory_space<vmem>>, vector<1x6x256xf32>
    %8 = vector.shape_cast %7 : vector<1x6x256xf32> to vector<6x256xf32>
    %9 = vector.shape_cast %6 : vector<6x256xf32> to vector<1x6x256xf32>
    tpu.vector_store %arg5[%c0_6, %c0_7, %c0_8], %9 {strides = array<i32>} : memref<1x6x256xf32, #tpu.memory_space<vmem>>, vector<1x6x256xf32>,
    return
  }
  func.func @transform_0(%arg0: i32, %arg1: i32) -> (i32, i32, i32) {
    %c0_i32 = arith.constant 0 : i32
    %c0_i32_0 = arith.constant 0 : i32
    return %arg0, %c0_i32, %arg1 : i32, i32, i32
  }
  func.func @transform_1(%arg0: i32, %arg1: i32) -> (i32, i32) {
    %c0_i32 = arith.constant 0 : i32
    %c0_i32_0 = arith.constant 0 : i32
    %c0_i32_1 = arith.constant 0 : i32
    return %c0_i32, %c0_i32_0 : i32, i32
  }
  func.func @transform_2(%arg0: i32, %arg1: i32) -> (i32, i32) {
    %c0_i32 = arith.constant 0 : i32
    %c0_i32_0 = arith.constant 0 : i32
    %c0_i32_1 = arith.constant 0 : i32
    return %c0_i32, %c0_i32_0 : i32, i32
  }
  func.func @transform_3(%arg0: i32, %arg1: i32) -> (i32, i32, i32) {
    %c0_i32 = arith.constant 0 : i32
    %c0_i32_0 = arith.constant 0 : i32
    return %arg0, %c0_i32, %arg1 : i32, i32, i32
  }
}

</mosaic_0001>

<llo_original>
// kernel: class_head_forward.1
$region0: #{class_head_forward.1}
  #allocation0 [shape = 'u32[]', space=smem, size = 0x4, offset = 0x4, fixed_abs, tag = 'smem constant byte address 0x4 - core index']
  #allocation1 [shape = 'u32[144,128]{1,0:T(1,128)}', space=vmem, size = 0x12000, scoped, tag = 'internal scratch']
  %s0 = inlined_call_operand.vmem [shape: bf16[2,64,256], index: 0, kind: input, shape index: {}]
  %s1 = inlined_call_operand.vmem [shape: bf16[6,64], index: 1, kind: input, shape index: {}]
  %s2 = inlined_call_operand.vmem [shape: f32[6,1], index: 2, kind: input, shape index: {}]
  %s3 = inlined_call_operand.vmem [shape: f32[2,6,256], index: 3, kind: output, shape index: {}]
  %s4 = sld [smem:[#allocation0]]
  $region45: #{class_head_forward.1} parent=0
    _
  %s6 = ssub.s32 1, %s4
  %s7 = scalar_select 0, %s6, %s4
  loop: start=0, step=1, limit=4
  $region2: #{class_head_forward.1} parent=0 // loop_pre_header
    _
  $region3: #{class_head_forward.1} parent=0 // loop_header
    %s9 = sphi 0, %s13
    %p10 = scmp.ge.s32.totalorder %s9, 4
    %s16 = sphi 0, %s28
    %s17 = sphi 0, %s24
    %s18 = sphi 0, %s16
    %s19 = sphi 0, %s17
    %s20 = sphi 0, %s18
    %s21 = sphi 0, %s19
    %s33 = sphi 0, %s35
    %s36 = sphi 0, %s33
    %s37 = sphi 0, %s36
    %s53 = sphi 0, %s37
    %s57 = sphi 0, %s57
    %s59 = sphi 0, %s57
    %s60 = sphi 0, %s59
    %s74 = sphi 0, %s60
    %s78 = sphi 0, %s78
    %s80 = sphi 0, %s78
    %s81 = sphi 0, %s80
    %s95 = sphi 0, %s81
    %s103 = sphi 0, %s105
    %s106 = sphi 0, %s103
    %s107 = sphi 0, %s106
    %s123 = sphi 0, %s107
  $region4: #{class_head_forward.1} parent=0 // loop_header_branch
    %12 = sbr.rel (%p10) target = $region8
  $region5: #{class_head_forward.1} parent=0 // loop_body
    %s14 = ssub.s32 %s9, 1
    %s15 = ssub.s32 %s9, 2
    %s22 = sadd.s32 1, %s17
    %p23 = scmp.ge.s32.totalorder %s22, 1
    %s24 = scalar_select %p23, 0, %s22
    %s25 = sadd.s32 1, %s16
    %s26 = scalar_select %p23, %s25, %s16
    %p27 = scmp.ge.s32.totalorder %s26, 2
    %s28 = scalar_select %p27, 0, %s26
    %s29 = ssub.s32 %s16, %s28
    %s30 = ssub.s32 %s17, %s24
    %s31 = sor.u32 %s29, %s30
    %p32 = scmp.eq.s32.totalorder %s31, 0
    %s34 = sadd.s32 %s33, 1
    %s35 = scalar_select %p32, %s33, %s34
    %p38 = pneg %p32
    %p39 = scmp.eq.s32.totalorder %s9, 1
    %p40 = por %p38, %p39
    %p41 = scmp.ne.s32.totalorder %s33, %s36
    %p42 = scmp.eq.s32.totalorder %s9, 0
    %p43 = por %p41, %p42
    %p44 = scmp.ne.s32.totalorder %s33, %s36
    %p45 = scmp.eq.s32.totalorder %s14, 1
    %p46 = por %p44, %p45
    %p47 = scmp.ne.s32.totalorder %s36, %s37
    %p48 = scmp.eq.s32.totalorder %s14, 0
    %p49 = por %p47, %p48
    %p50 = scmp.ne.s32.totalorder %s36, %s37
    %p51 = scmp.eq.s32.totalorder %s15, 1
    %p52 = por %p50, %p51
    %p54 = scmp.ne.s32.totalorder %s37, %s53
    %p55 = scmp.eq.s32.totalorder %s15, 0
    %p56 = por %p54, %p55
    %s58 = sadd.s32 %s57, 1
    %p61 = scmp.eq.s32.totalorder %s9, 1
    %p62 = scmp.ne.s32.totalorder %s57, %s59
    %p63 = scmp.eq.s32.totalorder %s9, 0
    %p64 = por %p62, %p63
    %p65 = scmp.ne.s32.totalorder %s57, %s59
    %p66 = scmp.eq.s32.totalorder %s14, 1
    %p67 = por %p65, %p66
    %p68 = scmp.ne.s32.totalorder %s59, %s60
    %p69 = scmp.eq.s32.totalorder %s14, 0
    %p70 = por %p68, %p69
    %p71 = scmp.ne.s32.totalorder %s59, %s60
    %p72 = scmp.eq.s32.totalorder %s15, 1
    %p73 = por %p71, %p72
    %p75 = scmp.ne.s32.totalorder %s60, %s74
    %p76 = scmp.eq.s32.totalorder %s15, 0
    %p77 = por %p75, %p76
    %s79 = sadd.s32 %s78, 1
    %p82 = scmp.eq.s32.totalorder %s9, 1
    %p83 = scmp.ne.s32.totalorder %s78, %s80
    %p84 = scmp.eq.s32.totalorder %s9, 0
    %p85 = por %p83, %p84
    %p86 = scmp.ne.s32.totalorder %s78, %s80
    %p87 = scmp.eq.s32.totalorder %s14, 1
    %p88 = por %p86, %p87
    %p89 = scmp.ne.s32.totalorder %s80, %s81
    %p90 = scmp.eq.s32.totalorder %s14, 0
    %p91 = por %p89, %p90
    %p92 = scmp.ne.s32.totalorder %s80, %s81
    %p93 = scmp.eq.s32.totalorder %s15, 1
    %p94 = por %p92, %p93
    %p96 = scmp.ne.s32.totalorder %s81, %s95
    %p97 = scmp.eq.s32.totalorder %s15, 0
    %p98 = por %p96, %p97
    %s99 = ssub.s32 %s16, %s28
    %s100 = ssub.s32 %s17, %s24
    %s101 = sor.u32 %s99, %s100
    %p102 = scmp.eq.s32.totalorder %s101, 0
    %s104 = sadd.s32 %s103, 1
    %s105 = scalar_select %p102, %s103, %s104
    %p108 = pneg %p102
    %p109 = scmp.eq.s32.totalorder %s9, 1
    %p110 = por %p108, %p109
    %p111 = scmp.ne.s32.totalorder %s103, %s106
    %p112 = scmp.eq.s32.totalorder %s9, 0
    %p113 = por %p111, %p112
    %p114 = scmp.ne.s32.totalorder %s103, %s106
    %p115 = scmp.eq.s32.totalorder %s14, 1
    %p116 = por %p114, %p115
    %p117 = scmp.ne.s32.totalorder %s106, %s107
    %p118 = scmp.eq.s32.totalorder %s14, 0
    %p119 = por %p117, %p118
    %p120 = scmp.ne.s32.totalorder %s106, %s107
    %p121 = scmp.eq.s32.totalorder %s15, 1
    %p122 = por %p120, %p121
    %p124 = scmp.ne.s32.totalorder %s107, %s123
    %p125 = scmp.eq.s32.totalorder %s15, 0
    %p126 = por %p124, %p125
    %p127 = scmp.le.s32.totalorder 1, %s9
    %p128 = scmp.lt.s32.totalorder %s9, 3
    %p129 = pnand %p127, %p128
    %p130 = pneg %p129
    // Predicated region
    $region9: #{class_head_forward.1} parent=5 // pred_check
      _
    $region10: #{class_head_forward.1} parent=5 // pred_check_branch
      %132 = sbr.rel (%p129) target = $region12
    $region11: #{class_head_forward.1} parent=5 // pred_region
      %s133 = ssub.s32 %s9, 1
      // Predicated region
      $region13: #{class_head_forward.1} parent=11 // pred_check
        %p134 = pneg %p70
      $region14: #{class_head_forward.1} parent=11 // pred_check_branch
        %136 = sbr.rel (%p134) target = $region16
      $region15: #{class_head_forward.1} parent=11 // pred_region
        _
      $region16: #{class_head_forward.1} parent=11 // pred_fallthru
        _
      // Predicated region
      $region17: #{class_head_forward.1} parent=11 // pred_check
        %p137 = pneg %p91
      $region18: #{class_head_forward.1} parent=11 // pred_check_branch
        %139 = sbr.rel (%p137) target = $region20
      $region19: #{class_head_forward.1} parent=11 // pred_region
        _
      $region20: #{class_head_forward.1} parent=11 // pred_fallthru
        _
    $region12: #{class_head_forward.1} parent=5 // pred_fallthru
      _
    %p140 = scmp.lt.s32.totalorder %s9, 2
    // Predicated region
    $region21: #{class_head_forward.1} parent=5 // pred_check
      %p141 = pneg %p140
    $region22: #{class_head_forward.1} parent=5 // pred_check_branch
      %143 = sbr.rel (%p141) target = $region24
    $region23: #{class_head_forward.1} parent=5 // pred_region
      // Predicated region
      $region25: #{class_head_forward.1} parent=23 // pred_check
        %p144 = pneg %p43
      $region26: #{class_head_forward.1} parent=23 // pred_check_branch
        %146 = sbr.rel (%p144) target = $region28
      $region27: #{class_head_forward.1} parent=23 // pred_region
        %s147 = smul.u32 2, %s17
        %p148 = scmp.lt.s32.totalorder %s16, 1
        %s149 = scalar_select %p148, %s16, 1
        %p150 = scmp.lt.s32.totalorder %s147, 1
        %s151 = scalar_select %p150, %s147, 1
        %s152 = smul.addr %s149, 16
        %s153 = sadd.s32 %s151, %s152
        %s154 = smul.addr %s153, 4
        %s155 = scalar_lea.vmem %s0, %s154
        %s156 = smul.u32 2, %s17
      $region28: #{class_head_forward.1} parent=23 // pred_fallthru
        _
    $region24: #{class_head_forward.1} parent=5 // pred_fallthru
      _
    %p157 = scmp.le.s32.totalorder 1, %s9
    %p158 = scmp.lt.s32.totalorder %s9, 3
    %p159 = pnand %p157, %p158
    %p160 = pneg %p159
    // Predicated region
    $region29: #{class_head_forward.1} parent=5 // pred_check
      _
    $region30: #{class_head_forward.1} parent=5 // pred_check_branch
      %162 = sbr.rel (%p159) target = $region32
    $region31: #{class_head_forward.1} parent=5 // pred_region
      %s163 = ssub.s32 %s9, 1
      %s164 = smul.u32 2, %s19
      %p165 = scmp.lt.s32.totalorder %s18, 1
      %s166 = scalar_select %p165, %s18, 1
      %p167 = scmp.lt.s32.totalorder %s164, 1
      %s168 = scalar_select %p167, %s164, 1
      %s169 = smul.addr %s166, 16
      %s170 = sadd.s32 %s168, %s169
      %s171 = smul.addr %s170, 4
      %s172 = scalar_lea.vmem %s0, %s171
      %p173 = pneg %p49
      %p174 = pneg %p46
      %p175 = pneg %p70
      %p176 = pneg %p67
      %p177 = pneg %p91
      %p178 = pneg %p88
      %p179 = pneg %p119
      %p180 = pneg %p116
      %s181 = smul.u32 2, %s19
      %p182 = scmp.lt.s32.totalorder %s18, 1
      %s183 = scalar_select %p182, %s18, 1
      %p184 = scmp.lt.s32.totalorder %s181, 1
      %s185 = scalar_select %p184, %s181, 1
      %s186 = smul.addr %s183, 2
      %s187 = sadd.s32 %s185, %s186
      %s188 = smul.addr %s187, 8
      %s189 = scalar_lea.vmem %s3, %s188
      %s190 = smul.u32 2, %s19
      %p191 = scmp.lt.s32.totalorder %s18, 1
      %s192 = scalar_select %p191, %s18, 1
      %p193 = scmp.lt.s32.totalorder %s190, 1
      %s194 = scalar_select %p193, %s190, 1
      %s195 = smul.addr %s192, 16
      %s196 = sadd.s32 %s194, %s195
      %s197 = smul.addr %s196, 4
      %s198 = scalar_lea.vmem %s0, %s197
      %s199 = smul.u32 2, %s19
      %s200 = smul.u32 2, %s19
      %p201 = scmp.lt.s32.totalorder %s18, 1
      %s202 = scalar_select %p201, %s18, 1
      %p203 = scmp.lt.s32.totalorder %s200, 1
      %s204 = scalar_select %p203, %s200, 1
      %s205 = smul.addr %s202, 2
      %s206 = sadd.s32 %s204, %s205
      %s207 = smul.addr %s206, 8
      %s208 = scalar_lea.vmem %s3, %s207
      %s209 = smul.u32 2, %s19
      %v211 = vld [vmem:[%s1] sm:$0x7]
      %v212 = vld [vmem:[%s2] sm:$0x3f]
      %v213 = vld [vmem:[%s198] sm:$0xff]
      %v214 = vld [vmem:[%s198 + $0x8] sm:$0xff]
      %v215 = vld [vmem:[%s198 + $0x10] sm:$0xff]
      %v216 = vld [vmem:[%s198 + $0x18] sm:$0xff]
      %v217 = vld [vmem:[%s198 + $0x20] sm:$0xff]
      %v218 = vld [vmem:[%s198 + $0x28] sm:$0xff]
      %v219 = vld [vmem:[%s198 + $0x30] sm:$0xff]
      %v220 = vld [vmem:[%s198 + $0x38] sm:$0xff]
      %222 = vset.pattern.permute.xlu0 0
      %223 = vperm.xlu0 %222, %v212
      %v224 = vpop.permute.xlu0 %223
      %v234 = vunpack.c.l.b16 %v213
      %v235 = vunpack.c.h.b16 %v213
      %v236 = vunpack.c.l.b16 %v214
      %v237 = vunpack.c.h.b16 %v214
      %v238 = vunpack.c.l.b16 %v215
      %v239 = vunpack.c.h.b16 %v215
      %v240 = vunpack.c.l.b16 %v216
      %v241 = vunpack.c.h.b16 %v216
      %v242 = vunpack.c.l.b16 %v217
      %v243 = vunpack.c.h.b16 %v217
      %v244 = vunpack.c.l.b16 %v218
      %v245 = vunpack.c.h.b16 %v218
      %v246 = vunpack.c.l.b16 %v219
      %v247 = vunpack.c.h.b16 %v219
      %v248 = vunpack.c.l.b16 %v220
      %v249 = vunpack.c.h.b16 %v220
      %v250 = vpack.c.b16 %v236, %v234
      %v251 = vpack.c.b16 %v237, %v235
      %v252 = vpack.c.b16 %v240, %v238
      %v253 = vpack.c.b16 %v241, %v239
      %v254 = vpack.c.b16 %v244, %v242
      %v255 = vpack.c.b16 %v245, %v243
      %v256 = vpack.c.b16 %v248, %v246
      %v257 = vpack.c.b16 %v249, %v247
      %vm266 = vcmask 523264
      %v268 = vsel %vm266, %v211, 0
      %270 = vmatprep.subr.bf16.mxu0 %v251
      %271 = vmatpush1.bf16.msra.mxu0 %v250
      %272 = vmatprep.subr.bf16.mxu0 %v253
      %273 = vmatpush1.bf16.msra.mxu0 %v252
      %274 = vmatprep.subr.bf16.mxu0 %v255
      %275 = vmatpush1.bf16.msra.mxu0 %v254
      %276 = vmatprep.subr.bf16.mxu0 %v257
      %277 = vmatpush1.bf16.msra.mxu0 %v256
      %278 = vmatprep.subr.bf16.mxu0 0
      %279 = vmatpush1.bf16.msra.mxu0 0
      %280 = vmatprep.subr.bf16.mxu0 0
      %281 = vmatpush1.bf16.msra.mxu0 0
      %282 = vmatprep.subr.bf16.mxu0 0
      %283 = vmatpush1.bf16.msra.mxu0 0
      %284 = vmatprep.subr.bf16.mxu0 0
      %285 = vmatpush1.bf16.msra.mxu0 0
      %286 = vmatprep.subr.bf16.mxu0 0
      %287 = vmatpush1.bf16.msra.mxu0 0
      %288 = vmatprep.subr.bf16.mxu0 0
      %289 = vmatpush1.bf16.msra.mxu0 0
      %290 = vmatprep.subr.bf16.mxu0 0
      %291 = vmatpush1.bf16.msra.mxu0 0
      %292 = vmatprep.subr.bf16.mxu0 0
      %293 = vmatpush1.bf16.msra.mxu0 0
      %294 = vmatprep.subr.bf16.mxu0 0
      %295 = vmatpush1.bf16.msra.mxu0 0
      %296 = vmatprep.subr.bf16.mxu0 0
      %297 = vmatpush1.bf16.msra.mxu0 0
      %298 = vmatprep.subr.bf16.mxu0 0
      %299 = vmatpush1.bf16.msra.mxu0 0
      %300 = vmatprep.subr.bf16.mxu0 0
      %301 = vmatpush1.bf16.msra.mxu0 0
      %302 = vmatprep.mubr.bf16.mxu0 0
      %303 = vmatmul.mubr.bf16.gmra.mrb[0].mxu0 %v268
      %v304 = vpop.f32.mrb[0].mxu0
      %v305 = vadd.f32 %v224, %v304
      %v306 = vpop.f32.mrb[0].mxu0
      %v307 = vadd.f32 %v224, %v306
      %v308 = vpop.f32.mrb[0].mxu0
      %v309 = vpop.f32.mrb[0].mxu0
      %310 = vdwg.mxu0
      %311 = vst [vmem:[%s208] sm:$0x3f] %v305
      %312 = vst [vmem:[%s208 + $0x8] sm:$0x3f] %v307
      %s313 = smul.u32 2, %s19
      %p314 = scmp.lt.s32.totalorder %s18, 1
      %s315 = scalar_select %p314, %s18, 1
      %p316 = scmp.lt.s32.totalorder %s313, 1
      %s317 = scalar_select %p316, %s313, 1
      %s318 = smul.addr %s315, 2
      %s319 = sadd.s32 %s317, %s318
      %s320 = smul.addr %s319, 8
      %s321 = scalar_lea.vmem %s3, %s320
      // Predicated region
      $region33: #{class_head_forward.1} parent=31 // pred_check
        %p322 = pneg %p116
      $region34: #{class_head_forward.1} parent=31 // pred_check_branch
        %324 = sbr.rel (%p322) target = $region36
      $region35: #{class_head_forward.1} parent=31 // pred_region
        %s325 = smul.u32 2, %s19
      $region36: #{class_head_forward.1} parent=31 // pred_fallthru
        _
    $region32: #{class_head_forward.1} parent=5 // pred_fallthru
      _
    %p326 = scmp.le.s32.totalorder 2, %s9
    // Predicated region
    $region37: #{class_head_forward.1} parent=5 // pred_check
      %p327 = pneg %p326
    $region38: #{class_head_forward.1} parent=5 // pred_check_branch
      %329 = sbr.rel (%p327) target = $region40
    $region39: #{class_head_forward.1} parent=5 // pred_region
      %s330 = ssub.s32 %s9, 2
      // Predicated region
      $region41: #{class_head_forward.1} parent=39 // pred_check
        %p331 = pneg %p122
      $region42: #{class_head_forward.1} parent=39 // pred_check_branch
        %333 = sbr.rel (%p331) target = $region44
      $region43: #{class_head_forward.1} parent=39 // pred_region
        %s334 = smul.u32 2, %s21
        %p335 = scmp.lt.s32.totalorder %s20, 1
        %s336 = scalar_select %p335, %s20, 1
        %p337 = scmp.lt.s32.totalorder %s334, 1
        %s338 = scalar_select %p337, %s334, 1
        %s339 = smul.addr %s336, 2
        %s340 = sadd.s32 %s338, %s339
        %s341 = smul.addr %s340, 8
        %s342 = scalar_lea.vmem %s3, %s341
      $region44: #{class_head_forward.1} parent=39 // pred_fallthru
        _
    $region40: #{class_head_forward.1} parent=5 // pred_fallthru
      _
  $region6: #{class_head_forward.1} parent=0 // loop_footer
    %s13 = sadd.s32 1, %s9
  $region7: #{class_head_forward.1} parent=0 // loop_footer_branch
    %8 = sbr.rel target = $region3
  $region8: #{class_head_forward.1} parent=0 // loop_exit
    _

</llo_original>
